<compile_context>
chip_gen: v7x
topology: tpu7x:2x2x1
jax: 0.10.0
libtpu: 0.0.40
codegen_flags: <defaults>
</compile_context>

<pallas_src>
import jax
import jax.numpy as jnp
from jax.experimental import pallas as pl
from jax.experimental.pallas import tpu as pltpu


def _round_up(x: int, m: int) -> int:
    return (x + m - 1) // m * m


# ---------------------------------------------------------------------------
# Kernel bodies
# ---------------------------------------------------------------------------

def _mlp_tail(x, w1_ref, b1_ref, w2_ref, b2_ref, out_ref):
    """out = tanh(x @ W1 + b1) @ W2 + b2 with f32 accumulation / f32 epilogue."""
    x = x.astype(w1_ref.dtype)                        # native / bf16 MXU dots
    h = jnp.dot(x, w1_ref[...], preferred_element_type=jnp.float32) + b1_ref[...]
    h = jnp.tanh(h).astype(w2_ref.dtype)
    out = jnp.dot(h, w2_ref[...], preferred_element_type=jnp.float32) + b2_ref[...]
    out_ref[...] = out.astype(out_ref.dtype)


def _slab_gather_kernel(cls_ref, hs_ref, w1_ref, b1_ref, w2_ref, b2_ref, out_ref):
    """Small S*H: the [tb, S, H] slab arrives via one pipelined BlockSpec DMA; the
    cls row is selected in-VMEM with a one-hot multiply+reduce (no per-row DMAs)."""
    tb, s, _ = hs_ref.shape
    pos = jax.lax.broadcasted_iota(jnp.int32, (tb, s), 1)
    onehot = (pos == cls_ref[...]).astype(hs_ref.dtype)          # [tb, S]
    # Exact in any dtype: every row sums one selected value plus zeros.
    x = jnp.sum(hs_ref[...] * onehot[:, :, None], axis=1)        # [tb, H]
    _mlp_tail(x, w1_ref, b1_ref, w2_ref, b2_ref, out_ref)


def _row_dma_kernel(rows_ref, hs_ref, w1_ref, b1_ref, w2_ref, b2_ref, out_ref,
                    x_buf, sem):
    """Large S*H: gather hidden_states[b, cls[b], :] rows straight from HBM.
    Flat row offsets are precomputed (one SMEM read per row), all tb copies of a
    tile share one DMA semaphore (single aggregate wait), and a (2, tb, H) double
    buffer overlaps tile g+1's gather with tile g's matmuls."""
    tb = x_buf.shape[1]
    g = pl.program_id(0)
    n_tiles = pl.num_programs(0)

    def issue(tile_idx, slot):
        base = tile_idx * tb
        for r in range(tb):
            row = rows_ref[base + r]                  # precomputed b*S + cls[b]
            pltpu.make_async_copy(
                hs_ref.at[pl.ds(row, 1)],
                x_buf.at[slot, pl.ds(r, 1)],
                sem.at[slot],
            ).start()

    @pl.when(g == 0)
    def _():                                          # prime slot 0
        issue(0, 0)

    @pl.when(g + 1 < n_tiles)
    def _():                                          # prefetch next tile's rows
        issue(g + 1, (g + 1) % 2)

    slot = g % 2
    # Single aggregate wait: tb row copies of H elems == one [tb, H] descriptor.
    pltpu.make_async_copy(hs_ref.at[pl.ds(0, tb)], x_buf.at[slot], sem.at[slot]).wait()

    _mlp_tail(x_buf[slot], w1_ref, b1_ref, w2_ref, b2_ref, out_ref)


# ---------------------------------------------------------------------------
# Wrapper
# ---------------------------------------------------------------------------

def make_property_head(w1, b1, w2, b2, *, param_dtype=None, batch_tile=None,
                       slab_row_bytes_max=32 * 1024):
    """Pad/cast the Linear parameters ONCE and return apply(hidden_states, cls_index).

    param_dtype: dtype used for the matmul operands (e.g. jnp.bfloat16 for
                 MXU-native dots); defaults to w1.dtype.  Biases, accumulation and
                 tanh are always f32.
    """
    H, SH = w1.shape
    L = w2.shape[1]
    if param_dtype is None:
        param_dtype = w1.dtype

    sh_pad = _round_up(SH, 128)       # lane-dense matmuls
    l_pad = _round_up(L, 128)         # unmasked output stores

    # Padded, VMEM-resident parameters (hoisted out of the per-call path).
    w1p = jnp.zeros((H, sh_pad), param_dtype).at[:, :SH].set(w1.astype(param_dtype))
    w2p = jnp.zeros((sh_pad, l_pad), param_dtype).at[:SH, :L].set(w2.astype(param_dtype))
    b1p = jnp.zeros((1, sh_pad), jnp.float32).at[0, :SH].set(b1.astype(jnp.float32))
    b2p = jnp.zeros((1, l_pad), jnp.float32).at[0, :L].set(b2.astype(jnp.float32))
    weight_bytes = ((w1p.size + w2p.size) * jnp.dtype(param_dtype).itemsize
                    + (b1p.size + b2p.size) * 4)

    def weight_specs(index_map):
        # Constant block index => resident across grid steps; Buffered(1) => no
        # second buffer (halves weight VMEM, matters on v7x's 64 MiB VMEM).
        return [
            pl.BlockSpec((H, sh_pad), index_map, pipeline_mode=pl.Buffered(1)),
            pl.BlockSpec((1, sh_pad), index_map, pipeline_mode=pl.Buffered(1)),
            pl.BlockSpec((sh_pad, l_pad), index_map, pipeline_mode=pl.Buffered(1)),
            pl.BlockSpec((1, l_pad), index_map, pipeline_mode=pl.Buffered(1)),
        ]

    def pick_tile(B):
        if batch_tile is not None:
            return batch_tile
        if B <= 8:
            return B                        # one full-batch tile (block dims == array dims)
        tile = min(256, _round_up(B, 8))    # big tiles amortize per-step overhead (v5e/v6e)
        if _round_up(B, tile) // tile < 2:
            # >= 2 tiles so the 'parallel' batch axis shards over both v7x TensorCores.
            tile = max(8, _round_up(pl.cdiv(B, 2), 8))
        return tile

    def compiler_params(semantics, vmem_est):
        kw = dict(dimension_semantics=(semantics,))
        if vmem_est > 30 * 1024 * 1024:     # default scoped VMEM limit is 32 MiB
            kw["vmem_limit_bytes"] = int(min(max(vmem_est * 5 // 4, 32 << 20), 100 << 20))
        return pltpu.CompilerParams(**kw)

    def apply(hidden_states, cls_index):
        B, S, H_in = hidden_states.shape
        assert H_in == H, (H_in, H)
        act_dtype = hidden_states.dtype
        isz = jnp.dtype(act_dtype).itemsize

        tile = pick_tile(B)
        b_pad = _round_up(B, tile)
        n_tiles = b_pad // tile

        # NOTE: out-of-range cls_index is clamped (the PyTorch reference would fault);
        # valid indices gather identically.
        cls_flat = jnp.clip(cls_index.reshape(-1).astype(jnp.int32), 0, S - 1)

        out_sds = jax.ShapeDtypeStruct((b_pad, l_pad), act_dtype)
        flops = 2 * b_pad * (H * sh_pad + sh_pad * l_pad)
        trans = b_pad * sh_pad

        if S * H * isz <= slab_row_bytes_max:
            # ---- slab-gather path: one pipelined [tile, S, H] DMA per grid step ----
            cls_col = jnp.pad(cls_flat, (0, b_pad - B)).reshape(b_pad, 1)
            vmem_est = (2 * tile * S * H * isz + weight_bytes
                        + 2 * tile * l_pad * isz + 2 * tile * 4)
            cost = pl.CostEstimate(
                flops=int(flops), transcendentals=int(trans),
                bytes_accessed=int(b_pad * S * H * isz + weight_bytes
                                   + b_pad * l_pad * isz + b_pad * 4))
            out_padded = pl.pallas_call(
                _slab_gather_kernel,
                out_shape=out_sds,
                grid=(n_tiles,),
                in_specs=[pl.BlockSpec((tile, 1), lambda g: (g, 0)),
                          pl.BlockSpec((tile, S, H), lambda g: (g, 0, 0))]
                         + weight_specs(lambda g: (0, 0)),
                out_specs=pl.BlockSpec((tile, l_pad), lambda g: (g, 0)),
                compiler_params=compiler_params("parallel", vmem_est),
                cost_estimate=cost,
            )(cls_col, hidden_states, w1p, b1p, w2p, b2p)
        else:
            # ---- per-row DMA gather path (double-buffered, aggregate wait) ----
            rows = cls_flat + jnp.arange(B, dtype=jnp.int32) * S   # flat b*S + cls[b]
            rows = jnp.pad(rows, (0, b_pad - B))                   # padded tail reads row 0
            hs_flat = hidden_states.reshape(B * S, H)              # free reshape, native dtype
            vmem_est = (2 * tile * H * isz + weight_bytes + 2 * tile * l_pad * isz)
            cost = pl.CostEstimate(
                flops=int(flops), transcendentals=int(trans),
                bytes_accessed=int(b_pad * H * isz + weight_bytes
                                   + b_pad * l_pad * isz + b_pad * 4))
            grid_spec = pltpu.PrefetchScalarGridSpec(
                num_scalar_prefetch=1,                             # flat row offsets -> SMEM
                grid=(n_tiles,),
                in_specs=[pl.BlockSpec(memory_space=pl.ANY)]       # hidden_states stays in HBM
                         + weight_specs(lambda g, rows_r: (0, 0)),
                out_specs=pl.BlockSpec((tile, l_pad), lambda g, rows_r: (g, 0)),
                scratch_shapes=[
                    pltpu.VMEM((2, tile, H), act_dtype),           # double-buffered gather
                    pltpu.SemaphoreType.DMA((2,)),                 # one sem per buffer slot
                ],
            )
            out_padded = pl.pallas_call(
                _row_dma_kernel,
                out_shape=out_sds,
                grid_spec=grid_spec,
                # manual cross-step double buffer => keep the grid axis sequential
                compiler_params=compiler_params("arbitrary", vmem_est),
                cost_estimate=cost,
            )(rows, hs_flat, w1p, b1p, w2p, b2p)

        return out_padded[:B, :L]

    return apply


def property_head(hidden_states, cls_index, w1, b1, w2, b2, **kwargs):
    """One-shot convenience wrapper; prefer make_property_head() so the padded /
    cast parameters are built once and reused across calls."""
    return make_property_head(w1, b1, w2, b2, **kwargs)(hidden_states, cls_index)


def property_head_ref(hidden_states, cls_index, w1, b1, w2, b2):
    B = hidden_states.shape[0]
    x = hidden_states[jnp.arange(B), cls_index]       # [B, H]
    h = jnp.tanh(x @ w1 + b1)
    return h @ w2 + b2


if __name__ == "__main__":
    key = jax.random.PRNGKey(0)

    # --- config 1: the shipped PropertyHead config (small S*H -> slab-gather path)
    #     hidden_size=32, summary_hidden_size=16, num_labels=4, summary_type='cls_index'
    B, S, H, SH, L = 2, 8, 32, 16, 4
    k_hs, k_cls, k_w1, k_b1, k_w2, k_b2, key = jax.random.split(key, 7)
    hidden_states = jax.random.normal(k_hs, (B, S, H), dtype=jnp.float32)
    cls_index = jax.random.randint(k_cls, (B,), 0, S, dtype=jnp.int32)
    w1 = jax.random.normal(k_w1, (H, SH), dtype=jnp.float32) * 0.05
    b1 = jax.random.normal(k_b1, (SH,), dtype=jnp.float32) * 0.05
    w2 = jax.random.normal(k_w2, (SH, L), dtype=jnp.float32) * 0.05
    b2 = jax.random.normal(k_b2, (L,), dtype=jnp.float32) * 0.05

    head = make_property_head(w1, b1, w2, b2)
    out = jax.block_until_ready(head(hidden_states, cls_index))
    ref = property_head_ref(hidden_states, cls_index, w1, b1, w2, b2)
    assert out.shape == (B, L)
    assert jnp.allclose(out, ref, atol=1e-5, rtol=1e-5), (out, ref)

    # Same config with bf16 activations + bf16 weights: native-dtype gather, bf16 MXU dots.
    head_bf16 = make_property_head(w1, b1, w2, b2, param_dtype=jnp.bfloat16)
    out_bf16 = jax.block_until_ready(
        head_bf16(hidden_states.astype(jnp.bfloat16), cls_index))
    assert out_bf16.dtype == jnp.bfloat16
    assert jnp.allclose(out_bf16.astype(jnp.float32), ref, atol=5e-2, rtol=5e-2), (out_bf16, ref)

    # --- config 2: larger S*H -> per-row DMA gather path (double-buffered, 2 tiles)
    B2, S2, H2, SH2, L2 = 16, 64, 256, 16, 4
    k_hs, k_cls, k_w1, k_b1, k_w2, k_b2, key = jax.random.split(key, 7)
    hidden_states2 = jax.random.normal(k_hs, (B2, S2, H2), dtype=jnp.float32)
    cls_index2 = jax.random.randint(k_cls, (B2,), 0, S2, dtype=jnp.int32)
    w1_2 = jax.random.normal(k_w1, (H2, SH2), dtype=jnp.float32) * 0.05
    b1_2 = jax.random.normal(k_b1, (SH2,), dtype=jnp.float32) * 0.05
    w2_2 = jax.random.normal(k_w2, (SH2, L2), dtype=jnp.float32) * 0.05
    b2_2 = jax.random.normal(k_b2, (L2,), dtype=jnp.float32) * 0.05

    head2 = make_property_head(w1_2, b1_2, w2_2, b2_2)
    out2 = jax.block_until_ready(head2(hidden_states2, cls_index2))
    ref2 = property_head_ref(hidden_states2, cls_index2, w1_2, b1_2, w2_2, b2_2)
    assert out2.shape == (B2, L2)
    assert jnp.allclose(out2, ref2, atol=1e-4, rtol=1e-4), (out2, ref2)

    print("KERNEL_OK")
</pallas_src>

<mosaic_0001>
module attributes {stable_mosaic.version = 11 : i64} {
  func.func @_slab_gather_kernel(%arg0: i32, %arg1: memref<2x1xi32, #tpu.memory_space<vmem>>, %arg2: memref<2x8x32xf32, #tpu.memory_space<vmem>>, %arg3: memref<32x128xf32, #tpu.memory_space<vmem>>, %arg4: memref<1x128xf32, #tpu.memory_space<vmem>>, %arg5: memref<128x128xf32, #tpu.memory_space<vmem>>, %arg6: memref<1x128xf32, #tpu.memory_space<vmem>>, %arg7: memref<2x128xf32, #tpu.memory_space<vmem>>) attributes {dimension_semantics = [#tpu.dimension_semantics<parallel>], iteration_bounds = array<i64: 1>, scalar_prefetch = 0 : i64, scratch_operands = 0 : i64, tpu.core_type = #tpu.core_type<tc>, window_params = [{transform_indices = @transform_0, window_bounds = array<i64: 2, 1>}, {transform_indices = @transform_1, window_bounds = array<i64: 2, 8, 32>}, {pipeline_mode = #tpu.pipeline_mode<synchronous>, transform_indices = @transform_2, window_bounds = array<i64: 32, 128>}, {pipeline_mode = #tpu.pipeline_mode<synchronous>, transform_indices = @transform_3, window_bounds = array<i64: 1, 128>}, {pipeline_mode = #tpu.pipeline_mode<synchronous>, transform_indices = @transform_4, window_bounds = array<i64: 128, 128>}, {pipeline_mode = #tpu.pipeline_mode<synchronous>, transform_indices = @transform_5, window_bounds = array<i64: 1, 128>}, {transform_indices = @transform_6, window_bounds = array<i64: 2, 128>}]} {
    %0 = tpu.iota {dimensions = array<i32: 1>} : vector<2x8xi32>
    %c0 = arith.constant 0 : index
    %c0_0 = arith.constant 0 : index
    %1 = vector.load %arg1[%c0, %c0_0] : memref<2x1xi32, #tpu.memory_space<vmem>>, vector<2x1xi32>
    %2 = vector.broadcast %1 : vector<2x1xi32> to vector<2x8xi32>
    %3 = arith.cmpi eq, %0, %2 : vector<2x8xi32>
    %4 = arith.extui %3 : vector<2x8xi1> to vector<2x8xi32>
    %5 = arith.sitofp %4 : vector<2x8xi32> to vector<2x8xf32>
    %c0_1 = arith.constant 0 : index
    %c0_2 = arith.constant 0 : index
    %c0_3 = arith.constant 0 : index
    %6 = vector.load %arg2[%c0_1, %c0_2, %c0_3] : memref<2x8x32xf32, #tpu.memory_space<vmem>>, vector<2x8x32xf32>
    %7 = vector.shape_cast %5 : vector<2x8xf32> to vector<2x8x1xf32>
    %8 = vector.broadcast %7 : vector<2x8x1xf32> to vector<2x8x32xf32>
    %9 = arith.mulf %6, %8 : vector<2x8x32xf32>
    %cst = arith.constant dense<0.000000e+00> : vector<2x32xf32>
    %10 = vector.multi_reduction <add>, %9, %cst [1] : vector<2x8x32xf32> to vector<2x32xf32>
    %c0_4 = arith.constant 0 : index
    %c0_5 = arith.constant 0 : index
    %11 = vector.load %arg3[%c0_4, %c0_5] : memref<32x128xf32, #tpu.memory_space<vmem>>, vector<32x128xf32>
    %cst_6 = arith.constant dense<0.000000e+00> : vector<2x128xf32>
    %12 = tpu.matmul %10, %11, %cst_6 {dimension_numbers = #tpu.dot_dimension_numbers<[1], [0], [0], [1], [0, 0, 1, 1], [], []>} : vector<2x32xf32>, vector<32x128xf32>, vector<2x128xf32> -> vector<2x128xf32>
    %c0_7 = arith.constant 0 : index
    %c0_8 = arith.constant 0 : index
    %13 = vector.load %arg4[%c0_7, %c0_8] : memref<1x128xf32, #tpu.memory_space<vmem>>, vector<1x128xf32>
    %14 = vector.broadcast %13 : vector<1x128xf32> to vector<2x128xf32>
    %15 = arith.addf %12, %14 : vector<2x128xf32>
    %16 = math.tanh %15 : vector<2x128xf32>
    %c0_9 = arith.constant 0 : index
    %c0_10 = arith.constant 0 : index
    %17 = vector.load %arg5[%c0_9, %c0_10] : memref<128x128xf32, #tpu.memory_space<vmem>>, vector<128x128xf32>
    %cst_11 = arith.constant dense<0.000000e+00> : vector<2x128xf32>
    %18 = tpu.matmul %16, %17, %cst_11 {dimension_numbers = #tpu.dot_dimension_numbers<[1], [0], [0], [1], [0, 0, 1, 1], [], []>} : vector<2x128xf32>, vector<128x128xf32>, vector<2x128xf32> -> vector<2x128xf32>
    %c0_12 = arith.constant 0 : index
    %c0_13 = arith.constant 0 : index
    %19 = vector.load %arg6[%c0_12, %c0_13] : memref<1x128xf32, #tpu.memory_space<vmem>>, vector<1x128xf32>
    %20 = vector.broadcast %19 : vector<1x128xf32> to vector<2x128xf32>
    %21 = arith.addf %18, %20 : vector<2x128xf32>
    %c0_14 = arith.constant 0 : index
    %c0_15 = arith.constant 0 : index
    %22 = vector.load %arg7[%c0_14, %c0_15] : memref<2x128xf32, #tpu.memory_space<vmem>>, vector<2x128xf32>
    tpu.vector_store %arg7[%c0_14, %c0_15], %21 {strides = array<i32>} : memref<2x128xf32, #tpu.memory_space<vmem>>, vector<2x128xf32>,
    return
  }
  func.func @transform_0(%arg0: i32) -> (i32, i32) {
    %c0_i32 = arith.constant 0 : i32
    %c0_i32_0 = arith.constant 0 : i32
    return %arg0, %c0_i32 : i32, i32
  }
  func.func @transform_1(%arg0: i32) -> (i32, i32, i32) {
    %c0_i32 = arith.constant 0 : i32
    %c0_i32_0 = arith.constant 0 : i32
    %c0_i32_1 = arith.constant 0 : i32
    return %arg0, %c0_i32, %c0_i32_0 : i32, i32, i32
  }
  func.func @transform_2(%arg0: i32) -> (i32, i32) {
    %c0_i32 = arith.constant 0 : i32
    %c0_i32_0 = arith.constant 0 : i32
    %c0_i32_1 = arith.constant 0 : i32
    return %c0_i32, %c0_i32_0 : i32, i32
  }
  func.func @transform_3(%arg0: i32) -> (i32, i32) {
    %c0_i32 = arith.constant 0 : i32
    %c0_i32_0 = arith.constant 0 : i32
    %c0_i32_1 = arith.constant 0 : i32
    return %c0_i32, %c0_i32_0 : i32, i32
  }
  func.func @transform_4(%arg0: i32) -> (i32, i32) {
    %c0_i32 = arith.constant 0 : i32
    %c0_i32_0 = arith.constant 0 : i32
    %c0_i32_1 = arith.constant 0 : i32
    return %c0_i32, %c0_i32_0 : i32, i32
  }
  func.func @transform_5(%arg0: i32) -> (i32, i32) {
    %c0_i32 = arith.constant 0 : i32
    %c0_i32_0 = arith.constant 0 : i32
    %c0_i32_1 = arith.constant 0 : i32
    return %c0_i32, %c0_i32_0 : i32, i32
  }
  func.func @transform_6(%arg0: i32) -> (i32, i32) {
    %c0_i32 = arith.constant 0 : i32
    %c0_i32_0 = arith.constant 0 : i32
    return %arg0, %c0_i32 : i32, i32
  }
}

</mosaic_0001>

<llo_original>
// kernel: tpu_custom_call.1
$region0: #{tpu_custom_call.1}
  #allocation0 [shape = 'u32[]', space=smem, size = 0x4, offset = 0x4, fixed_abs, tag = 'smem constant byte address 0x4 - core index']
  #allocation1 [shape = 'u32[144,128]{1,0:T(1,128)}', space=vmem, size = 0x12000, scoped, tag = 'internal scratch']
  %s0 = inlined_call_operand.vmem [shape: s32[2,1], index: 0, kind: input, shape index: {}]
  %s1 = inlined_call_operand.hbm [shape: f32[2,8,32], index: 1, kind: input, shape index: {}]
  %s2 = inlined_call_operand.hbm [shape: f32[32,128], index: 2, kind: input, shape index: {}]
  %s3 = inlined_call_operand.vmem [shape: f32[1,128], index: 3, kind: input, shape index: {}]
  %s4 = inlined_call_operand.hbm [shape: f32[128,128], index: 4, kind: input, shape index: {}]
  %s5 = inlined_call_operand.vmem [shape: f32[1,128], index: 5, kind: input, shape index: {}]
  %s6 = inlined_call_operand.hbm [shape: f32[2,128], index: 6, kind: output, shape index: {}]
  %s7 = sld [smem:[#allocation0]]
  $region46: #{tpu_custom_call.1} parent=0
    _
  %s9 = ssub.s32 1, %s7
  %s10 = scalar_select 0, %s9, %s7
  $region1: #{tpu_custom_call.1} parent=0
    #allocation2 [shape = 'u8[8192]{0}', space=vmem, size = 0x2000, scoped, tag = 'input window, operand 1, single buffered']
    #allocation3 [shape = 's32[1]{0}', space=sflag, size = 0x4, scoped, tag = 'scoped memory for tpu_custom_call.1']
    #allocation4 [shape = 's32[1]{0}', space=sflag, size = 0x4, scoped, tag = 'scoped memory for tpu_custom_call.1']
    #allocation5 [shape = 'u8[16384]{0}', space=vmem, size = 0x4000, scoped, tag = 'input window, operand 2, single buffered']
    #allocation6 [shape = 's32[1]{0}', space=sflag, size = 0x4, scoped, tag = 'scoped memory for tpu_custom_call.1']
    #allocation7 [shape = 'u8[65536]{0}', space=vmem, size = 0x10000, scoped, tag = 'input window, operand 4, single buffered']
    #allocation8 [shape = 'u8[1024]{0}', space=vmem, size = 0x400, scoped, tag = 'output window, operand 0, single buffered']
    %11 = vsyncpa [#allocation3], 0
    %12 = vsyncpa [#allocation6], 0
    %13 = vsyncpa [#allocation4], 0
    // Predicated region
    $region2: #{tpu_custom_call.1} parent=1 // pred_check
      _
    $region3: #{tpu_custom_call.1} parent=1 // pred_check_branch
      %15 = sbr.rel (0) target = $region5
    $region4: #{tpu_custom_call.1} parent=1 // pred_region
      _
    $region5: #{tpu_custom_call.1} parent=1 // pred_fallthru
      _
    // Predicated region
    $region6: #{tpu_custom_call.1} parent=1 // pred_check
      _
    $region7: #{tpu_custom_call.1} parent=1 // pred_check_branch
      %17 = sbr.rel (0) target = $region9
    $region8: #{tpu_custom_call.1} parent=1 // pred_region
      %s19 = ssub.s32 256, 256
      %20 = vsyncadd [#allocation3], %s19
      %s21 = sshll.u32 [#allocation2], 4
      %s22 = int_to_ptr.vmem [resolvable:$true] %s21
      %27 = dma.hbm_to_vmem [thread:$0]  %s1, 256, %s22, [#allocation3], 128, 128, 8
    $region9: #{tpu_custom_call.1} parent=1 // pred_fallthru
      _
    // Predicated region
    $region10: #{tpu_custom_call.1} parent=1 // pred_check
      _
    $region11: #{tpu_custom_call.1} parent=1 // pred_check_branch
      %29 = sbr.rel (0) target = $region13
    $region12: #{tpu_custom_call.1} parent=1 // pred_region
      %s31 = ssub.s32 512, 512
      %32 = vsyncadd [#allocation6], %s31
      %s33 = sshll.u32 [#allocation5], 4
      %s34 = int_to_ptr.vmem [resolvable:$true] %s33
      %39 = dma.hbm_to_vmem [thread:$0]  %s2, 512, %s34, [#allocation6], 128, 128, 8
    $region13: #{tpu_custom_call.1} parent=1 // pred_fallthru
      _
    // Predicated region
    $region14: #{tpu_custom_call.1} parent=1 // pred_check
      _
    $region15: #{tpu_custom_call.1} parent=1 // pred_check_branch
      %41 = sbr.rel (0) target = $region17
    $region16: #{tpu_custom_call.1} parent=1 // pred_region
      _
    $region17: #{tpu_custom_call.1} parent=1 // pred_fallthru
      _
    // Predicated region
    $region18: #{tpu_custom_call.1} parent=1 // pred_check
      _
    $region19: #{tpu_custom_call.1} parent=1 // pred_check_branch
      %43 = sbr.rel (0) target = $region21
    $region20: #{tpu_custom_call.1} parent=1 // pred_region
      %s45 = ssub.s32 2048, 2048
      %46 = vsyncadd [#allocation6], %s45
      %s47 = sshll.u32 [#allocation7], 4
      %s48 = int_to_ptr.vmem [resolvable:$true] %s47
      %53 = dma.hbm_to_vmem [thread:$0]  %s4, 2048, %s48, [#allocation6], 128, 128, 8
    $region21: #{tpu_custom_call.1} parent=1 // pred_fallthru
      _
    // Predicated region
    $region22: #{tpu_custom_call.1} parent=1 // pred_check
      _
    $region23: #{tpu_custom_call.1} parent=1 // pred_check_branch
      %55 = sbr.rel (0) target = $region25
    $region24: #{tpu_custom_call.1} parent=1 // pred_region
      _
    $region25: #{tpu_custom_call.1} parent=1 // pred_fallthru
      _
    // Predicated region
    $region26: #{tpu_custom_call.1} parent=1 // pred_check
      _
    $region27: #{tpu_custom_call.1} parent=1 // pred_check_branch
      %57 = sbr.rel (0) target = $region29
    $region28: #{tpu_custom_call.1} parent=1 // pred_region
      %58 = dma.done [#allocation3], 256
    $region29: #{tpu_custom_call.1} parent=1 // pred_fallthru
      _
    // Predicated region
    $region30: #{tpu_custom_call.1} parent=1 // pred_check
      _
    $region31: #{tpu_custom_call.1} parent=1 // pred_check_branch
      %60 = sbr.rel (0) target = $region33
    $region32: #{tpu_custom_call.1} parent=1 // pred_region
      %61 = dma.done [#allocation6], 512
    $region33: #{tpu_custom_call.1} parent=1 // pred_fallthru
      _
    // Predicated region
    $region34: #{tpu_custom_call.1} parent=1 // pred_check
      _
    $region35: #{tpu_custom_call.1} parent=1 // pred_check_branch
      %63 = sbr.rel (0) target = $region37
    $region36: #{tpu_custom_call.1} parent=1 // pred_region
      %64 = dma.done [#allocation6], 2048
    $region37: #{tpu_custom_call.1} parent=1 // pred_fallthru
      _
    %v65 = vlaneseq
    %v66 = vand.u32 %v65, 127
    %v67 = vld [vmem:[%s0] sm:$0x3]
    %68 = vset.pattern.permute.xlu0 0
    %69 = vperm.xlu0 %68, %v67
    %v70 = vpop.permute.xlu0 %69
    %vm71 = vcmp.eq.s32.totalorder %v66, %v70
    %v72 = vsel %vm71, 1, 0
    %v73 = vcvt.s32.f32 %v72
    %v74 = vld [vmem:[#allocation2] sm:$0xff]
    %v75 = vld [vmem:[#allocation2 + $0x8] sm:$0xff]
    %v76 = vlaneseq
    %v77 = vshrl.u32 %v76, 7
    %v78 = vsub.s32 0, %v77
    %v79 = vrot.slane %v73, %v78
    %81 = vbcast.lane.b32.xlu0 %v79, 256
    %v82 = vpop.permute.xlu0 %81
    %v83 = vlaneseq
    %v84 = vshrl.u32 %v83, 7
    %v85 = vsub.s32 1, %v84
    %v86 = vrot.slane %v73, %v85
    %88 = vbcast.lane.b32.xlu0 %v86, 256
    %v89 = vpop.permute.xlu0 %88
    %v90 = vmul.f32 %v74, %v82
    %v91 = vmul.f32 %v75, %v89
    %vm92 = vcmask 261120
    %v93 = vsel %vm92, %v90, 0.0
    %v94 = vrot.slane %v93, 4
    %v95 = vadd.f32 %v93, %v94
    %v96 = vrot.slane %v95, 2
    %v97 = vadd.f32 %v95, %v96
    %v98 = vrot.slane %v97, 1
    %v99 = vadd.f32 %v97, %v98
    %v100 = vsel %vm92, %v91, 0.0
    %v101 = vrot.slane %v100, 4
    %v102 = vadd.f32 %v100, %v101
    %v103 = vrot.slane %v102, 2
    %v104 = vadd.f32 %v102, %v103
    %v105 = vrot.slane %v104, 1
    %v106 = vadd.f32 %v104, %v105
    %v107 = vld [vmem:[#allocation5] sm:$0xff]
    %v108 = vld [vmem:[#allocation5 + $0x8] sm:$0xff]
    %v109 = vld [vmem:[#allocation5 + $0x10] sm:$0xff]
    %v110 = vld [vmem:[#allocation5 + $0x18] sm:$0xff]
    %v111 = vld [vmem:[%s3] sm:$0x1]
    %v113 = vlaneseq
    %v114 = vshrl.u32 %v113, 7
    %v115 = vsub.s32 0, %v114
    %v116 = vrot.slane %v111, %v115
    %vm120 = vcmask 1041409
    %v121 = vsel %vm120, %v106, %v99
    %v122 = vsel %vm92, %v121, 0
    %124 = vmatprep.subr.mxu0 0.0
    %125 = vmatpush1.msra.mxu0 %v107
    %126 = vmatprep.subr.mxu0 0.0
    %127 = vmatpush1.msra.mxu0 %v108
    %128 = vmatprep.subr.mxu0 0.0
    %129 = vmatpush1.msra.mxu0 %v109
    %130 = vmatprep.subr.mxu0 0.0
    %131 = vmatpush1.msra.mxu0 %v110
    %132 = vmatprep.subr.mxu0 0.0
    %133 = vmatpush1.msra.mxu0 0.0
    %134 = vmatprep.subr.mxu0 0.0
    %135 = vmatpush1.msra.mxu0 0.0
    %136 = vmatprep.subr.mxu0 0.0
    %137 = vmatpush1.msra.mxu0 0.0
    %138 = vmatprep.subr.mxu0 0.0
    %139 = vmatpush1.msra.mxu0 0.0
    %140 = vmatprep.subr.mxu0 0.0
    %141 = vmatpush1.msra.mxu0 0.0
    %142 = vmatprep.subr.mxu0 0.0
    %143 = vmatpush1.msra.mxu0 0.0
    %144 = vmatprep.subr.mxu0 0.0
    %145 = vmatpush1.msra.mxu0 0.0
    %146 = vmatprep.subr.mxu0 0.0
    %147 = vmatpush1.msra.mxu0 0.0
    %148 = vmatprep.subr.mxu0 0.0
    %149 = vmatpush1.msra.mxu0 0.0
    %150 = vmatprep.subr.mxu0 0.0
    %151 = vmatpush1.msra.mxu0 0.0
    %152 = vmatprep.subr.mxu0 0.0
    %153 = vmatpush1.msra.mxu0 0.0
    %154 = vmatprep.subr.mxu0 0.0
    %155 = vmatpush1.msra.mxu0 0.0
    %156 = vmatprep.subr.mxu0 0.0
    %157 = vmatpush1.msra.mxu0 0.0
    %158 = vmatprep.subr.mxu0 0.0
    %159 = vmatpush1.msra.mxu0 0.0
    %160 = vmatprep.subr.mxu0 0.0
    %161 = vmatpush1.msra.mxu0 0.0
    %162 = vmatprep.subr.mxu0 0.0
    %163 = vmatpush1.msra.mxu0 0.0
    %164 = vmatprep.subr.mxu0 0.0
    %165 = vmatpush1.msra.mxu0 0.0
    %166 = vmatprep.subr.mxu0 0.0
    %167 = vmatpush1.msra.mxu0 0.0
    %168 = vmatprep.subr.mxu0 0.0
    %169 = vmatpush1.msra.mxu0 0.0
    %170 = vmatprep.subr.mxu0 0.0
    %171 = vmatpush1.msra.mxu0 0.0
    %172 = vmatprep.subr.mxu0 0.0
    %173 = vmatpush1.msra.mxu0 0.0
    %174 = vmatprep.subr.mxu0 0.0
    %175 = vmatpush1.msra.mxu0 0.0
    %176 = vmatprep.subr.mxu0 0.0
    %177 = vmatpush1.msra.mxu0 0.0
    %178 = vmatprep.subr.mxu0 0.0
    %179 = vmatpush1.msra.mxu0 0.0
    %180 = vmatprep.subr.mxu0 0.0
    %181 = vmatpush1.msra.mxu0 0.0
    %182 = vmatprep.subr.mxu0 0.0
    %183 = vmatpush1.msra.mxu0 0.0
    %184 = vmatprep.subr.mxu0 0.0
    %185 = vmatpush1.msra.mxu0 0.0
    %186 = vmatprep.subr.mxu0 0.0
    %187 = vmatpush1.msra.mxu0 0.0
    %188 = vmatprep.mubr.f32.mxu0 0.0
    %189 = vmatmul.mubr.f32.gmra.mrb[0].mxu0 %v122
    %v190 = vpop.f32.mrb[0].mxu0
    %v191 = vadd.f32 %v116, %v190
    %v192 = vpop.f32.mrb[0].mxu0
    %193 = vdwg.mxu0
    %v194 = vtanh.pop %v191
    %v195 = vld [vmem:[#allocation7] sm:$0xff]
    %v196 = vld [vmem:[#allocation7 + $0x8] sm:$0xff]
    %v197 = vld [vmem:[#allocation7 + $0x10] sm:$0xff]
    %v198 = vld [vmem:[#allocation7 + $0x18] sm:$0xff]
    %v199 = vld [vmem:[#allocation7 + $0x20] sm:$0xff]
    %v200 = vld [vmem:[#allocation7 + $0x28] sm:$0xff]
    %v201 = vld [vmem:[#allocation7 + $0x30] sm:$0xff]
    %v202 = vld [vmem:[#allocation7 + $0x38] sm:$0xff]
    %v203 = vld [vmem:[#allocation7 + $0x40] sm:$0xff]
    %v204 = vld [vmem:[#allocation7 + $0x48] sm:$0xff]
    %v205 = vld [vmem:[#allocation7 + $0x50] sm:$0xff]
    %v206 = vld [vmem:[#allocation7 + $0x58] sm:$0xff]
    %v207 = vld [vmem:[#allocation7 + $0x60] sm:$0xff]
    %v208 = vld [vmem:[#allocation7 + $0x68] sm:$0xff]
    %v209 = vld [vmem:[#allocation7 + $0x70] sm:$0xff]
    %v210 = vld [vmem:[#allocation7 + $0x78] sm:$0xff]
    %v211 = vld [vmem:[%s5] sm:$0x1]
    %v213 = vlaneseq
    %v214 = vshrl.u32 %v213, 7
    %v215 = vsub.s32 0, %v214
    %v216 = vrot.slane %v211, %v215
    %218 = vmatprep.subr.mxu0 0.0
    %219 = vmatpush1.msra.mxu0 %v195
    %220 = vmatprep.subr.mxu0 0.0
    %221 = vmatpush1.msra.mxu0 %v196
    %222 = vmatprep.subr.mxu0 0.0
    %223 = vmatpush1.msra.mxu0 %v197
    %224 = vmatprep.subr.mxu0 0.0
    %225 = vmatpush1.msra.mxu0 %v198
    %226 = vmatprep.subr.mxu0 0.0
    %227 = vmatpush1.msra.mxu0 %v199
    %228 = vmatprep.subr.mxu0 0.0
    %229 = vmatpush1.msra.mxu0 %v200
    %230 = vmatprep.subr.mxu0 0.0
    %231 = vmatpush1.msra.mxu0 %v201
    %232 = vmatprep.subr.mxu0 0.0
    %233 = vmatpush1.msra.mxu0 %v202
    %234 = vmatprep.subr.mxu0 0.0
    %235 = vmatpush1.msra.mxu0 %v203
    %236 = vmatprep.subr.mxu0 0.0
    %237 = vmatpush1.msra.mxu0 %v204
    %238 = vmatprep.subr.mxu0 0.0
    %239 = vmatpush1.msra.mxu0 %v205
    %240 = vmatprep.subr.mxu0 0.0
    %241 = vmatpush1.msra.mxu0 %v206
    %242 = vmatprep.subr.mxu0 0.0
    %243 = vmatpush1.msra.mxu0 %v207
    %244 = vmatprep.subr.mxu0 0.0
    %245 = vmatpush1.msra.mxu0 %v208
    %246 = vmatprep.subr.mxu0 0.0
    %247 = vmatpush1.msra.mxu0 %v209
    %248 = vmatprep.subr.mxu0 0.0
    %249 = vmatpush1.msra.mxu0 %v210
    %250 = vmatprep.subr.mxu0 0.0
    %251 = vmatpush1.msra.mxu0 0.0
    %252 = vmatprep.subr.mxu0 0.0
    %253 = vmatpush1.msra.mxu0 0.0
    %254 = vmatprep.subr.mxu0 0.0
    %255 = vmatpush1.msra.mxu0 0.0
    %256 = vmatprep.subr.mxu0 0.0
    %257 = vmatpush1.msra.mxu0 0.0
    %258 = vmatprep.subr.mxu0 0.0
    %259 = vmatpush1.msra.mxu0 0.0
    %260 = vmatprep.subr.mxu0 0.0
    %261 = vmatpush1.msra.mxu0 0.0
    %262 = vmatprep.subr.mxu0 0.0
    %263 = vmatpush1.msra.mxu0 0.0
    %264 = vmatprep.subr.mxu0 0.0
    %265 = vmatpush1.msra.mxu0 0.0
    %266 = vmatprep.subr.mxu0 0.0
    %267 = vmatpush1.msra.mxu0 0.0
    %268 = vmatprep.subr.mxu0 0.0
    %269 = vmatpush1.msra.mxu0 0.0
    %270 = vmatprep.subr.mxu0 0.0
    %271 = vmatpush1.msra.mxu0 0.0
    %272 = vmatprep.subr.mxu0 0.0
    %273 = vmatpush1.msra.mxu0 0.0
    %274 = vmatprep.subr.mxu0 0.0
    %275 = vmatpush1.msra.mxu0 0.0
    %276 = vmatprep.subr.mxu0 0.0
    %277 = vmatpush1.msra.mxu0 0.0
    %278 = vmatprep.subr.mxu0 0.0
    %279 = vmatpush1.msra.mxu0 0.0
    %280 = vmatprep.subr.mxu0 0.0
    %281 = vmatpush1.msra.mxu0 0.0
    %282 = vmatprep.mubr.f32.mxu0 0.0
    %283 = vmatmul.mubr.f32.gmra.mrb[0].mxu0 %v194
    %v284 = vpop.f32.mrb[0].mxu0
    %v285 = vadd.f32 %v216, %v284
    %v286 = vpop.f32.mrb[0].mxu0
    %287 = vdwg.mxu0
    %288 = vst [vmem:[#allocation8] sm:$0x3] %v285
    // Predicated region
    $region38: #{tpu_custom_call.1} parent=1 // pred_check
      _
    $region39: #{tpu_custom_call.1} parent=1 // pred_check_branch
      %290 = sbr.rel (0) target = $region41
    $region40: #{tpu_custom_call.1} parent=1 // pred_region
      %s292 = ssub.s32 32, 32
      %293 = vsyncadd [#allocation4], %s292
      %s295 = sshll.u32 [#allocation8], 4
      %s296 = int_to_ptr.vmem [resolvable:$true] %s295
      %298 = dma.vmem_to_hbm [thread:$0]  %s296, 32, %s6, [#allocation4]
    $region41: #{tpu_custom_call.1} parent=1 // pred_fallthru
      _
    // Predicated region
    $region42: #{tpu_custom_call.1} parent=1 // pred_check
      _
    $region43: #{tpu_custom_call.1} parent=1 // pred_check_branch
      %300 = sbr.rel (0) target = $region45
    $region44: #{tpu_custom_call.1} parent=1 // pred_region
      %301 = dma.done [#allocation4], 32
    $region45: #{tpu_custom_call.1} parent=1 // pred_fallthru
      _
    %302 = vsyncpa [#allocation3], 1
    %303 = vsyncpa [#allocation6], 1
    %304 = vsyncpa [#allocation4], 1

</llo_original>
